<compile_context>
chip_gen: v5e
topology: v5e:2x2
jax: 0.10.0
libtpu: 0.0.40
codegen_flags: <defaults>
</compile_context>

<pallas_src>
import jax
import jax.numpy as jnp
from jax.experimental import pallas as pl
from jax.experimental.pallas import tpu as pltpu


# ---------------------------------------------------------------------------
# Kernel
# ---------------------------------------------------------------------------
def policy_kernel(x_ref, w1_ref, b1_ref, w2_ref, b2_ref, wh_ref, bh_ref,
                  out_ref):
    """One batch-tile of the fused MLP.

    x_ref  : (TM, obs_dim) f32   observations (unpadded lanes)
    w*     : bf16 weights, b* : (1, N) f32 row-vector biases
    out_ref: (TM, HEAD_PAD) bf16 lane-dense slab = [mu | value | zero-pad]
    """
    x = x_ref[...].astype(jnp.bfloat16)                           # MXU operand
    # hidden layer 1: Linear + ReLU  (bias/ReLU kept in f32; f32 accumulation)
    h = jnp.dot(x, w1_ref[...], preferred_element_type=jnp.float32) + b1_ref[...]
    h = jnp.maximum(h, 0.0)
    # hidden layer 2: Linear + ReLU
    h = jnp.dot(h.astype(jnp.bfloat16), w2_ref[...],
                preferred_element_type=jnp.float32) + b2_ref[...]
    h = jnp.maximum(h, 0.0)
    # fused heads: [mu | value] in one lane-dense 128-wide matmul, bf16 store
    head = jnp.dot(h.astype(jnp.bfloat16), wh_ref[...],
                   preferred_element_type=jnp.float32) + bh_ref[...]
    out_ref[...] = head.astype(out_ref.dtype)


# ---------------------------------------------------------------------------
# Wrapper
# ---------------------------------------------------------------------------
def _round_up(n, m):
    return ((n + m - 1) // m) * m


HEAD_PAD = 128    # act_dim + 1 (10) padded up to one full lane group
GRAIN = 16        # sublane grain (bf16 output packing)
TM_MAX = 1024     # batch tile upper bound


def policy_net_forward(x, packed, *, act_dim):
    """x: (B, obs_dim) f32 -> (mu (B,act_dim) f32, std (act_dim,) f32, value (B,) f32)."""
    B, obs_dim = x.shape
    h1 = packed["w1"].shape[1]
    h2 = packed["w2"].shape[1]

    # Batch tiling: big tiles (amortize ~0.35us/step), 16-row grain, and an
    # even number of grid steps whenever there is more than one so v7x's two
    # TensorCores both get work on the "parallel" axis.
    b_min = _round_up(max(B, GRAIN), GRAIN)
    n_steps = -(-b_min // TM_MAX)                     # cdiv
    if n_steps > 1 and n_steps % 2 == 1:
        n_steps += 1
    tm = _round_up(-(-b_min // n_steps), GRAIN)
    b_pad = tm * n_steps

    x_pad = x if b_pad == B else jnp.pad(x, ((0, b_pad - B), (0, 0)))

    flops = 2 * b_pad * (obs_dim * h1 + h1 * h2 + h2 * HEAD_PAD)
    bytes_accessed = (
        x_pad.size * 4                                               # streamed in
        + (packed["w1"].size + packed["w2"].size + packed["wh"].size) * 2
        + (packed["b1"].size + packed["b2"].size + packed["bh"].size) * 4
        + b_pad * HEAD_PAD * 2)                                      # bf16 slab out

    out = pl.pallas_call(
        policy_kernel,
        out_shape=jax.ShapeDtypeStruct((b_pad, HEAD_PAD), jnp.bfloat16),
        grid_spec=pltpu.PrefetchScalarGridSpec(
            num_scalar_prefetch=0,
            grid=(n_steps,),
            in_specs=[
                pl.BlockSpec((tm, obs_dim), lambda i: (i, 0)),      # x tile (streams)
                pl.BlockSpec((obs_dim, h1), lambda i: (0, 0)),      # w1 (VMEM-resident)
                pl.BlockSpec((1, h1), lambda i: (0, 0)),            # b1
                pl.BlockSpec((h1, h2), lambda i: (0, 0)),           # w2
                pl.BlockSpec((1, h2), lambda i: (0, 0)),            # b2
                pl.BlockSpec((h2, HEAD_PAD), lambda i: (0, 0)),     # fused head W
                pl.BlockSpec((1, HEAD_PAD), lambda i: (0, 0)),      # fused head b
            ],
            out_specs=pl.BlockSpec((tm, HEAD_PAD), lambda i: (i, 0)),
        ),
        compiler_params=pltpu.CompilerParams(
            dimension_semantics=("parallel",)),
        cost_estimate=pl.CostEstimate(
            flops=flops, transcendentals=0, bytes_accessed=bytes_accessed),
    )(x_pad, packed["w1"], packed["b1"], packed["w2"], packed["b2"],
      packed["wh"], packed["bh"])

    # One combined slice over the slab, then split; cast back to f32 for API parity.
    head = out[:B, :act_dim + 1].astype(jnp.float32)
    mu = head[:, :act_dim]
    value = head[:, act_dim]
    std = jnp.exp(packed["logstd"])                   # batch-independent; hoisted out
    return mu, std, value


# ---------------------------------------------------------------------------
# Parameter construction / packing
# ---------------------------------------------------------------------------
def init_params(key, obs_dim, act_dim, hidden=(256, 256)):
    """Raw (torch.nn.Linear-like) f32 parameters."""
    def linear(key, fan_in, fan_out):
        kw, kb = jax.random.split(key)
        bound = 1.0 / jnp.sqrt(float(fan_in))
        w = jax.random.uniform(kw, (fan_in, fan_out), jnp.float32, -bound, bound)
        b = jax.random.uniform(kb, (fan_out,), jnp.float32, -bound, bound)
        return w, b

    k1, k2, k3, k4 = jax.random.split(key, 4)
    w1, b1 = linear(k1, obs_dim, hidden[0])
    w2, b2 = linear(k2, hidden[0], hidden[1])
    wmu, bmu = linear(k3, hidden[1], act_dim)
    wv, bv = linear(k4, hidden[1], 1)
    logstd = jnp.zeros((act_dim,), jnp.float32)
    return dict(w1=w1, b1=b1, w2=w2, b2=b2,
                wmu=wmu, bmu=bmu, wv=wv, bv=bv, logstd=logstd)


def pack_params(p):
    """One-time kernel-layout packing: fuse heads into a 128-lane slab, bf16 weights."""
    obs_dim, h1 = p["w1"].shape
    h2 = p["w2"].shape[1]
    act_dim = p["wmu"].shape[1]
    assert act_dim + 1 <= HEAD_PAD

    # Fused head: [wmu | wv | 0-pad] -> (h2, HEAD_PAD).
    wh = jnp.zeros((h2, HEAD_PAD), jnp.float32)
    wh = wh.at[:, :act_dim].set(p["wmu"]).at[:, act_dim:act_dim + 1].set(p["wv"])
    bh = jnp.zeros((1, HEAD_PAD), jnp.float32)
    bh = bh.at[0, :act_dim].set(p["bmu"]).at[0, act_dim].set(p["bv"][0])

    return dict(
        w1=p["w1"].astype(jnp.bfloat16),              # (obs_dim, h1), unpadded
        b1=p["b1"].reshape(1, h1).astype(jnp.float32),
        w2=p["w2"].astype(jnp.bfloat16),
        b2=p["b2"].reshape(1, h2).astype(jnp.float32),
        wh=wh.astype(jnp.bfloat16),
        bh=bh,
        logstd=p["logstd"],
    )


# ---------------------------------------------------------------------------
# Pure-JAX reference on the same packed (bf16) parameters
# ---------------------------------------------------------------------------
def _reference(x, packed, act_dim):
    h = jnp.dot(x.astype(jnp.bfloat16), packed["w1"],
                preferred_element_type=jnp.float32) + packed["b1"]
    h = jnp.maximum(h, 0.0)
    h = jnp.dot(h.astype(jnp.bfloat16), packed["w2"],
                preferred_element_type=jnp.float32) + packed["b2"]
    h = jnp.maximum(h, 0.0)
    head = jnp.dot(h.astype(jnp.bfloat16), packed["wh"],
                   preferred_element_type=jnp.float32) + packed["bh"]
    head = head.astype(jnp.bfloat16).astype(jnp.float32)   # match kernel's bf16 store
    mu = head[:, :act_dim]
    value = head[:, act_dim]
    std = jnp.exp(packed["logstd"])
    return mu, std, value


# ---------------------------------------------------------------------------
if __name__ == "__main__":
    # MultiUAVEnv(num_uavs=3): obs_dim = 3*6 = 18, act_dim = 3*3 = 9
    num_uavs = 3
    obs_dim, act_dim = num_uavs * 6, num_uavs * 3
    batch = 8

    key = jax.random.PRNGKey(0)
    kx, kp = jax.random.split(key)
    x = jax.random.normal(kx, (batch, obs_dim), jnp.float32)
    raw = init_params(kp, obs_dim, act_dim)
    packed = pack_params(raw)

    fwd = jax.jit(policy_net_forward, static_argnames=("act_dim",))
    mu, std, value = fwd(x, packed, act_dim=act_dim)
    jax.block_until_ready((mu, std, value))

    mu_r, std_r, val_r = _reference(x, packed, act_dim)
    assert mu.shape == (batch, act_dim)
    assert std.shape == (act_dim,)
    assert value.shape == (batch,)
    # TODO(synk): bf16 weights/activations give ~1e-2 relative error vs a pure
    # f32 torch PolicyNet; tolerances below compare against the bf16 reference.
    assert jnp.allclose(mu, mu_r, atol=2e-2, rtol=2e-2), float(jnp.abs(mu - mu_r).max())
    assert jnp.allclose(std, std_r, atol=1e-6)
    assert jnp.allclose(value, val_r, atol=2e-2, rtol=2e-2), float(jnp.abs(value - val_r).max())

    print("KERNEL_OK")
</pallas_src>

<mosaic_0001>
module attributes {stable_mosaic.version = 11 : i64} {
  func.func @policy_kernel(%arg0: i32, %arg1: memref<16x18xf32, #tpu.memory_space<vmem>>, %arg2: memref<18x256xbf16, #tpu.memory_space<vmem>>, %arg3: memref<1x256xf32, #tpu.memory_space<vmem>>, %arg4: memref<256x256xbf16, #tpu.memory_space<vmem>>, %arg5: memref<1x256xf32, #tpu.memory_space<vmem>>, %arg6: memref<256x128xbf16, #tpu.memory_space<vmem>>, %arg7: memref<1x128xf32, #tpu.memory_space<vmem>>, %arg8: memref<16x128xbf16, #tpu.memory_space<vmem>>) attributes {dimension_semantics = [#tpu.dimension_semantics<parallel>], iteration_bounds = array<i64: 1>, scalar_prefetch = 0 : i64, scratch_operands = 0 : i64, tpu.core_type = #tpu.core_type<tc>, window_params = [{transform_indices = @transform_0, window_bounds = array<i64: 16, 18>}, {pipeline_mode = #tpu.pipeline_mode<synchronous>, transform_indices = @transform_1, window_bounds = array<i64: 18, 256>}, {pipeline_mode = #tpu.pipeline_mode<synchronous>, transform_indices = @transform_2, window_bounds = array<i64: 1, 256>}, {pipeline_mode = #tpu.pipeline_mode<synchronous>, transform_indices = @transform_3, window_bounds = array<i64: 256, 256>}, {pipeline_mode = #tpu.pipeline_mode<synchronous>, transform_indices = @transform_4, window_bounds = array<i64: 1, 256>}, {pipeline_mode = #tpu.pipeline_mode<synchronous>, transform_indices = @transform_5, window_bounds = array<i64: 256, 128>}, {pipeline_mode = #tpu.pipeline_mode<synchronous>, transform_indices = @transform_6, window_bounds = array<i64: 1, 128>}, {transform_indices = @transform_7, window_bounds = array<i64: 16, 128>}]} {
    %c0 = arith.constant 0 : index
    %c0_0 = arith.constant 0 : index
    %0 = vector.load %arg1[%c0, %c0_0] : memref<16x18xf32, #tpu.memory_space<vmem>>, vector<16x18xf32>
    %1 = arith.truncf %0 : vector<16x18xf32> to vector<16x18xbf16>
    %c0_1 = arith.constant 0 : index
    %c0_2 = arith.constant 0 : index
    %2 = vector.load %arg2[%c0_1, %c0_2] : memref<18x256xbf16, #tpu.memory_space<vmem>>, vector<18x256xbf16>
    %cst = arith.constant dense<0.000000e+00> : vector<16x256xf32>
    %3 = tpu.matmul %1, %2, %cst {dimension_numbers = #tpu.dot_dimension_numbers<[1], [0], [0], [1], [0, 0, 1, 1], [], []>} : vector<16x18xbf16>, vector<18x256xbf16>, vector<16x256xf32> -> vector<16x256xf32>
    %c0_3 = arith.constant 0 : index
    %c0_4 = arith.constant 0 : index
    %4 = vector.load %arg3[%c0_3, %c0_4] : memref<1x256xf32, #tpu.memory_space<vmem>>, vector<1x256xf32>
    %5 = vector.broadcast %4 : vector<1x256xf32> to vector<16x256xf32>
    %6 = arith.addf %3, %5 : vector<16x256xf32>
    %cst_5 = arith.constant 0.000000e+00 : f32
    %7 = vector.broadcast %cst_5 : f32 to vector<16x256xf32>
    %8 = arith.maximumf %6, %7 : vector<16x256xf32>
    %9 = arith.truncf %8 : vector<16x256xf32> to vector<16x256xbf16>
    %c0_6 = arith.constant 0 : index
    %c0_7 = arith.constant 0 : index
    %10 = vector.load %arg4[%c0_6, %c0_7] : memref<256x256xbf16, #tpu.memory_space<vmem>>, vector<256x256xbf16>
    %cst_8 = arith.constant dense<0.000000e+00> : vector<16x256xf32>
    %11 = tpu.matmul %9, %10, %cst_8 {dimension_numbers = #tpu.dot_dimension_numbers<[1], [0], [0], [1], [0, 0, 1, 1], [], []>} : vector<16x256xbf16>, vector<256x256xbf16>, vector<16x256xf32> -> vector<16x256xf32>
    %c0_9 = arith.constant 0 : index
    %c0_10 = arith.constant 0 : index
    %12 = vector.load %arg5[%c0_9, %c0_10] : memref<1x256xf32, #tpu.memory_space<vmem>>, vector<1x256xf32>
    %13 = vector.broadcast %12 : vector<1x256xf32> to vector<16x256xf32>
    %14 = arith.addf %11, %13 : vector<16x256xf32>
    %cst_11 = arith.constant 0.000000e+00 : f32
    %15 = vector.broadcast %cst_11 : f32 to vector<16x256xf32>
    %16 = arith.maximumf %14, %15 : vector<16x256xf32>
    %17 = arith.truncf %16 : vector<16x256xf32> to vector<16x256xbf16>
    %c0_12 = arith.constant 0 : index
    %c0_13 = arith.constant 0 : index
    %18 = vector.load %arg6[%c0_12, %c0_13] : memref<256x128xbf16, #tpu.memory_space<vmem>>, vector<256x128xbf16>
    %cst_14 = arith.constant dense<0.000000e+00> : vector<16x128xf32>
    %19 = tpu.matmul %17, %18, %cst_14 {dimension_numbers = #tpu.dot_dimension_numbers<[1], [0], [0], [1], [0, 0, 1, 1], [], []>} : vector<16x256xbf16>, vector<256x128xbf16>, vector<16x128xf32> -> vector<16x128xf32>
    %c0_15 = arith.constant 0 : index
    %c0_16 = arith.constant 0 : index
    %20 = vector.load %arg7[%c0_15, %c0_16] : memref<1x128xf32, #tpu.memory_space<vmem>>, vector<1x128xf32>
    %21 = vector.broadcast %20 : vector<1x128xf32> to vector<16x128xf32>
    %22 = arith.addf %19, %21 : vector<16x128xf32>
    %23 = arith.truncf %22 : vector<16x128xf32> to vector<16x128xbf16>
    %c0_17 = arith.constant 0 : index
    %c0_18 = arith.constant 0 : index
    %24 = vector.load %arg8[%c0_17, %c0_18] : memref<16x128xbf16, #tpu.memory_space<vmem>>, vector<16x128xbf16>
    tpu.vector_store %arg8[%c0_17, %c0_18], %23 {strides = array<i32>} : memref<16x128xbf16, #tpu.memory_space<vmem>>, vector<16x128xbf16>,
    return
  }
  func.func @transform_0(%arg0: i32) -> (i32, i32) {
    %c0_i32 = arith.constant 0 : i32
    %c0_i32_0 = arith.constant 0 : i32
    return %arg0, %c0_i32 : i32, i32
  }
  func.func @transform_1(%arg0: i32) -> (i32, i32) {
    %c0_i32 = arith.constant 0 : i32
    %c0_i32_0 = arith.constant 0 : i32
    %c0_i32_1 = arith.constant 0 : i32
    return %c0_i32, %c0_i32_0 : i32, i32
  }
  func.func @transform_2(%arg0: i32) -> (i32, i32) {
    %c0_i32 = arith.constant 0 : i32
    %c0_i32_0 = arith.constant 0 : i32
    %c0_i32_1 = arith.constant 0 : i32
    return %c0_i32, %c0_i32_0 : i32, i32
  }
  func.func @transform_3(%arg0: i32) -> (i32, i32) {
    %c0_i32 = arith.constant 0 : i32
    %c0_i32_0 = arith.constant 0 : i32
    %c0_i32_1 = arith.constant 0 : i32
    return %c0_i32, %c0_i32_0 : i32, i32
  }
  func.func @transform_4(%arg0: i32) -> (i32, i32) {
    %c0_i32 = arith.constant 0 : i32
    %c0_i32_0 = arith.constant 0 : i32
    %c0_i32_1 = arith.constant 0 : i32
    return %c0_i32, %c0_i32_0 : i32, i32
  }
  func.func @transform_5(%arg0: i32) -> (i32, i32) {
    %c0_i32 = arith.constant 0 : i32
    %c0_i32_0 = arith.constant 0 : i32
    %c0_i32_1 = arith.constant 0 : i32
    return %c0_i32, %c0_i32_0 : i32, i32
  }
  func.func @transform_6(%arg0: i32) -> (i32, i32) {
    %c0_i32 = arith.constant 0 : i32
    %c0_i32_0 = arith.constant 0 : i32
    %c0_i32_1 = arith.constant 0 : i32
    return %c0_i32, %c0_i32_0 : i32, i32
  }
  func.func @transform_7(%arg0: i32) -> (i32, i32) {
    %c0_i32 = arith.constant 0 : i32
    %c0_i32_0 = arith.constant 0 : i32
    return %arg0, %c0_i32 : i32, i32
  }
}

</mosaic_0001>

<llo_original>
// kernel: policy_net_forward.1
$region0: #{policy_net_forward.1}
  #allocation0 [shape = 'u32[]', space=smem, size = 0x4, offset = 0x4, fixed_abs, tag = 'smem constant byte address 0x4 - core index']
  #allocation1 [shape = 'u32[72,128]{1,0:T(1,128)}', space=vmem, size = 0x9000, scoped, tag = 'internal scratch']
  %s0 = inlined_call_operand.vmem [shape: f32[16,18], index: 0, kind: input, shape index: {}]
  %s1 = inlined_call_operand.vmem [shape: bf16[18,256], index: 1, kind: input, shape index: {}]
  %s2 = inlined_call_operand.vmem [shape: f32[1,256], index: 2, kind: input, shape index: {}]
  %s3 = inlined_call_operand.hbm [shape: bf16[256,256], index: 3, kind: input, shape index: {}]
  %s4 = inlined_call_operand.vmem [shape: f32[1,256], index: 4, kind: input, shape index: {}]
  %s5 = inlined_call_operand.hbm [shape: bf16[256,128], index: 5, kind: input, shape index: {}]
  %s6 = inlined_call_operand.hbm [shape: f32[1,128], index: 6, kind: input, shape index: {}]
  %s7 = inlined_call_operand.vmem [shape: bf16[16,128], index: 7, kind: output, shape index: {}]
  %s8 = sld [smem:[#allocation0]]
  $region50: #{policy_net_forward.1} parent=0
    _
  %s10 = ssub.s32 1, %s8
  %s11 = scalar_select 0, %s10, %s8
  $region1: #{policy_net_forward.1} parent=0
    #allocation2 [shape = 'u8[131072]{0}', space=vmem, size = 0x20000, scoped, tag = 'input window, operand 3, single buffered']
    #allocation3 [shape = 's32[1]{0}', space=sflag, size = 0x4, scoped, tag = 'scoped memory for policy_net_forward.1']
    #allocation4 [shape = 'u8[65536]{0}', space=vmem, size = 0x10000, scoped, tag = 'input window, operand 5, single buffered']
    #allocation5 [shape = 's32[1]{0}', space=sflag, size = 0x4, scoped, tag = 'scoped memory for policy_net_forward.1']
    #allocation6 [shape = 'u8[512]{0}', space=vmem, size = 0x400, scoped, tag = 'input window, operand 6, single buffered']
    %12 = vsyncpa [#allocation3], 0
    %13 = vsyncpa [#allocation5], 0
    // Predicated region
    $region2: #{policy_net_forward.1} parent=1 // pred_check
      _
    $region3: #{policy_net_forward.1} parent=1 // pred_check_branch
      %15 = sbr.rel (0) target = $region5
    $region4: #{policy_net_forward.1} parent=1 // pred_region
      _
    $region5: #{policy_net_forward.1} parent=1 // pred_fallthru
      _
    // Predicated region
    $region6: #{policy_net_forward.1} parent=1 // pred_check
      _
    $region7: #{policy_net_forward.1} parent=1 // pred_check_branch
      %17 = sbr.rel (0) target = $region9
    $region8: #{policy_net_forward.1} parent=1 // pred_region
      _
    $region9: #{policy_net_forward.1} parent=1 // pred_fallthru
      _
    // Predicated region
    $region10: #{policy_net_forward.1} parent=1 // pred_check
      _
    $region11: #{policy_net_forward.1} parent=1 // pred_check_branch
      %19 = sbr.rel (0) target = $region13
    $region12: #{policy_net_forward.1} parent=1 // pred_region
      _
    $region13: #{policy_net_forward.1} parent=1 // pred_fallthru
      _
    // Predicated region
    $region14: #{policy_net_forward.1} parent=1 // pred_check
      _
    $region15: #{policy_net_forward.1} parent=1 // pred_check_branch
      %21 = sbr.rel (0) target = $region17
    $region16: #{policy_net_forward.1} parent=1 // pred_region
      %23 = vsyncadd [#allocation3], 0
      %s24 = sshll.u32 %s3, 4
      %s25 = int_to_ptr.hbm [resolvable:$true] %s24
      %s26 = sshll.u32 [#allocation2], 4
      %s27 = int_to_ptr.vmem [resolvable:$true] %s26
      %32 = dma.hbm_to_vmem [thread:$0]  %s25, 4096, %s27, [#allocation3], 128, 128, 8
    $region17: #{policy_net_forward.1} parent=1 // pred_fallthru
      _
    // Predicated region
    $region18: #{policy_net_forward.1} parent=1 // pred_check
      _
    $region19: #{policy_net_forward.1} parent=1 // pred_check_branch
      %34 = sbr.rel (0) target = $region21
    $region20: #{policy_net_forward.1} parent=1 // pred_region
      _
    $region21: #{policy_net_forward.1} parent=1 // pred_fallthru
      _
    // Predicated region
    $region22: #{policy_net_forward.1} parent=1 // pred_check
      _
    $region23: #{policy_net_forward.1} parent=1 // pred_check_branch
      %36 = sbr.rel (0) target = $region25
    $region24: #{policy_net_forward.1} parent=1 // pred_region
      %38 = vsyncadd [#allocation5], 0
      %s39 = sshll.u32 %s5, 4
      %s40 = int_to_ptr.hbm [resolvable:$true] %s39
      %s41 = sshll.u32 [#allocation4], 4
      %s42 = int_to_ptr.vmem [resolvable:$true] %s41
      %47 = dma.hbm_to_vmem [thread:$0]  %s40, 2048, %s42, [#allocation5], 64, 64, 4
    $region25: #{policy_net_forward.1} parent=1 // pred_fallthru
      _
    // Predicated region
    $region26: #{policy_net_forward.1} parent=1 // pred_check
      _
    $region27: #{policy_net_forward.1} parent=1 // pred_check_branch
      %49 = sbr.rel (0) target = $region29
    $region28: #{policy_net_forward.1} parent=1 // pred_region
      %51 = vsyncadd [#allocation5], 0
      %s53 = sshll.u32 %s6, 4
      %s54 = int_to_ptr.hbm [resolvable:$true] %s53
      %s55 = sshll.u32 [#allocation6], 4
      %s56 = int_to_ptr.vmem [resolvable:$true] %s55
      %58 = dma.hbm_to_vmem [thread:$0]  %s54, 16, %s56, [#allocation5]
    $region29: #{policy_net_forward.1} parent=1 // pred_fallthru
      _
    // Predicated region
    $region30: #{policy_net_forward.1} parent=1 // pred_check
      _
    $region31: #{policy_net_forward.1} parent=1 // pred_check_branch
      %60 = sbr.rel (0) target = $region33
    $region32: #{policy_net_forward.1} parent=1 // pred_region
      %62 = dma.done [#allocation3], 4096
    $region33: #{policy_net_forward.1} parent=1 // pred_fallthru
      _
    // Predicated region
    $region34: #{policy_net_forward.1} parent=1 // pred_check
      _
    $region35: #{policy_net_forward.1} parent=1 // pred_check_branch
      %64 = sbr.rel (0) target = $region37
    $region36: #{policy_net_forward.1} parent=1 // pred_region
      %66 = dma.done [#allocation5], 2048
    $region37: #{policy_net_forward.1} parent=1 // pred_fallthru
      _
    // Predicated region
    $region38: #{policy_net_forward.1} parent=1 // pred_check
      _
    $region39: #{policy_net_forward.1} parent=1 // pred_check_branch
      %68 = sbr.rel (0) target = $region41
    $region40: #{policy_net_forward.1} parent=1 // pred_region
      %70 = dma.done [#allocation5], 16
    $region41: #{policy_net_forward.1} parent=1 // pred_fallthru
      _
    %v72 = vld [vmem:[%s0] sm:$0xff]
    %v73 = vld [vmem:[%s0 + $0x8] sm:$0xff]
    %v74 = vpack.c.bf16 %v73, %v72
    %v75 = vld [vmem:[%s1] sm:$0xff]
    %v76 = vld [vmem:[%s1 + $0x8] sm:$0xff]
    %v77 = vld [vmem:[%s1 + $0x10] sm:$0x11]
    %v78 = vld [vmem:[%s2] sm:$0x3]
    %v80 = vperm.slane %v78, 0
    %v81 = vperm.slane %v78, 1
    %v87 = vunpack.c.l.b16 %v75
    %v88 = vunpack.c.h.b16 %v75
    %v89 = vunpack.c.l.b16 %v76
    %v90 = vunpack.c.h.b16 %v76
    %v91 = vunpack.c.l.b16 %v77
    %v92 = vunpack.c.h.b16 %v77
    %v93 = vpack.c.b16 %v89, %v87
    %v94 = vpack.c.b16 %v90, %v88
    %v95 = vpack.c.b16 %v91, %v91
    %v96 = vpack.c.b16 %v92, %v92
    %vm99 = vcmask 146432
    %v101 = vsel %vm99, %v74, 0
    %vm103 = vcmask 1040384
    %v105 = vsel %vm103, %v95, 0
    %v108 = vsel %vm103, %v96, 0
    %110 = vmatpush.bf16.msra.mxu0 0
    %111 = vmatpush.bf16.msra.mxu0 0
    %112 = vmatpush.bf16.msra.mxu0 0
    %113 = vmatpush.bf16.msra.mxu0 0
    %114 = vmatpush.bf16.msra.mxu0 0
    %115 = vmatpush.bf16.msra.mxu0 0
    %116 = vmatpush.bf16.msra.mxu0 %v105
    %117 = vmatpush.bf16.msra.mxu0 %v93
    %118 = vmatmul.bf16.gmra.mxu0 %v101
    %v119 = vpop.f32.mrf.mxu0
    %v120 = vadd.f32 %v80, %v119
    %v121 = vpop.f32.mrf.mxu0
    %v122 = vadd.f32 %v80, %v121
    %123 = vdwg.mxu0
    %124 = vmatpush.bf16.msra.mxu0 0
    %125 = vmatpush.bf16.msra.mxu0 0
    %126 = vmatpush.bf16.msra.mxu0 0
    %127 = vmatpush.bf16.msra.mxu0 0
    %128 = vmatpush.bf16.msra.mxu0 0
    %129 = vmatpush.bf16.msra.mxu0 0
    %130 = vmatpush.bf16.msra.mxu0 %v108
    %131 = vmatpush.bf16.msra.mxu0 %v94
    %132 = vmatmul.bf16.gmra.mxu0 %v101
    %v133 = vpop.f32.mrf.mxu0
    %v134 = vadd.f32 %v81, %v133
    %v135 = vpop.f32.mrf.mxu0
    %v136 = vadd.f32 %v81, %v135
    %137 = vdwg.mxu0
    %v138 = vmax.f32 %v120, 0.0
    %v139 = vmax.f32 %v134, 0.0
    %v140 = vmax.f32 %v122, 0.0
    %v141 = vmax.f32 %v136, 0.0
    %v142 = vpack.c.bf16 %v140, %v138
    %v143 = vpack.c.bf16 %v141, %v139
    %v144 = vld [vmem:[#allocation2] sm:$0xff]
    %v145 = vld [vmem:[#allocation2 + $0x8] sm:$0xff]
    %v146 = vld [vmem:[#allocation2 + $0x10] sm:$0xff]
    %v147 = vld [vmem:[#allocation2 + $0x18] sm:$0xff]
    %v148 = vld [vmem:[#allocation2 + $0x20] sm:$0xff]
    %v149 = vld [vmem:[#allocation2 + $0x28] sm:$0xff]
    %v150 = vld [vmem:[#allocation2 + $0x30] sm:$0xff]
    %v151 = vld [vmem:[#allocation2 + $0x38] sm:$0xff]
    %v152 = vld [vmem:[#allocation2 + $0x40] sm:$0xff]
    %v153 = vld [vmem:[#allocation2 + $0x48] sm:$0xff]
    %v154 = vld [vmem:[#allocation2 + $0x50] sm:$0xff]
    %v155 = vld [vmem:[#allocation2 + $0x58] sm:$0xff]
    %v156 = vld [vmem:[#allocation2 + $0x60] sm:$0xff]
    %v157 = vld [vmem:[#allocation2 + $0x68] sm:$0xff]
    %v158 = vld [vmem:[#allocation2 + $0x70] sm:$0xff]
    %v159 = vld [vmem:[#allocation2 + $0x78] sm:$0xff]
    %v160 = vld [vmem:[#allocation2 + $0x80] sm:$0xff]
    %v161 = vld [vmem:[#allocation2 + $0x88] sm:$0xff]
    %v162 = vld [vmem:[#allocation2 + $0x90] sm:$0xff]
    %v163 = vld [vmem:[#allocation2 + $0x98] sm:$0xff]
    %v164 = vld [vmem:[#allocation2 + $0xa0] sm:$0xff]
    %v165 = vld [vmem:[#allocation2 + $0xa8] sm:$0xff]
    %v166 = vld [vmem:[#allocation2 + $0xb0] sm:$0xff]
    %v167 = vld [vmem:[#allocation2 + $0xb8] sm:$0xff]
    %v168 = vld [vmem:[#allocation2 + $0xc0] sm:$0xff]
    %v169 = vld [vmem:[#allocation2 + $0xc8] sm:$0xff]
    %v170 = vld [vmem:[#allocation2 + $0xd0] sm:$0xff]
    %v171 = vld [vmem:[#allocation2 + $0xd8] sm:$0xff]
    %v172 = vld [vmem:[#allocation2 + $0xe0] sm:$0xff]
    %v173 = vld [vmem:[#allocation2 + $0xe8] sm:$0xff]
    %v174 = vld [vmem:[#allocation2 + $0xf0] sm:$0xff]
    %v175 = vld [vmem:[#allocation2 + $0xf8] sm:$0xff]
    %v176 = vld [vmem:[%s4] sm:$0x3]
    %v178 = vperm.slane %v176, 0
    %v179 = vperm.slane %v176, 1
    %v214 = vunpack.c.l.b16 %v144
    %v215 = vunpack.c.h.b16 %v144
    %v216 = vunpack.c.l.b16 %v145
    %v217 = vunpack.c.h.b16 %v145
    %v218 = vunpack.c.l.b16 %v146
    %v219 = vunpack.c.h.b16 %v146
    %v220 = vunpack.c.l.b16 %v147
    %v221 = vunpack.c.h.b16 %v147
    %v222 = vunpack.c.l.b16 %v148
    %v223 = vunpack.c.h.b16 %v148
    %v224 = vunpack.c.l.b16 %v149
    %v225 = vunpack.c.h.b16 %v149
    %v226 = vunpack.c.l.b16 %v150
    %v227 = vunpack.c.h.b16 %v150
    %v228 = vunpack.c.l.b16 %v151
    %v229 = vunpack.c.h.b16 %v151
    %v230 = vunpack.c.l.b16 %v152
    %v231 = vunpack.c.h.b16 %v152
    %v232 = vunpack.c.l.b16 %v153
    %v233 = vunpack.c.h.b16 %v153
    %v234 = vunpack.c.l.b16 %v154
    %v235 = vunpack.c.h.b16 %v154
    %v236 = vunpack.c.l.b16 %v155
    %v237 = vunpack.c.h.b16 %v155
    %v238 = vunpack.c.l.b16 %v156
    %v239 = vunpack.c.h.b16 %v156
    %v240 = vunpack.c.l.b16 %v157
    %v241 = vunpack.c.h.b16 %v157
    %v242 = vunpack.c.l.b16 %v158
    %v243 = vunpack.c.h.b16 %v158
    %v244 = vunpack.c.l.b16 %v159
    %v245 = vunpack.c.h.b16 %v159
    %v246 = vunpack.c.l.b16 %v160
    %v247 = vunpack.c.h.b16 %v160
    %v248 = vunpack.c.l.b16 %v161
    %v249 = vunpack.c.h.b16 %v161
    %v250 = vunpack.c.l.b16 %v162
    %v251 = vunpack.c.h.b16 %v162
    %v252 = vunpack.c.l.b16 %v163
    %v253 = vunpack.c.h.b16 %v163
    %v254 = vunpack.c.l.b16 %v164
    %v255 = vunpack.c.h.b16 %v164
    %v256 = vunpack.c.l.b16 %v165
    %v257 = vunpack.c.h.b16 %v165
    %v258 = vunpack.c.l.b16 %v166
    %v259 = vunpack.c.h.b16 %v166
    %v260 = vunpack.c.l.b16 %v167
    %v261 = vunpack.c.h.b16 %v167
    %v262 = vunpack.c.l.b16 %v168
    %v263 = vunpack.c.h.b16 %v168
    %v264 = vunpack.c.l.b16 %v169
    %v265 = vunpack.c.h.b16 %v169
    %v266 = vunpack.c.l.b16 %v170
    %v267 = vunpack.c.h.b16 %v170
    %v268 = vunpack.c.l.b16 %v171
    %v269 = vunpack.c.h.b16 %v171
    %v270 = vunpack.c.l.b16 %v172
    %v271 = vunpack.c.h.b16 %v172
    %v272 = vunpack.c.l.b16 %v173
    %v273 = vunpack.c.h.b16 %v173
    %v274 = vunpack.c.l.b16 %v174
    %v275 = vunpack.c.h.b16 %v174
    %v276 = vunpack.c.l.b16 %v175
    %v277 = vunpack.c.h.b16 %v175
    %v278 = vpack.c.b16 %v216, %v214
    %v279 = vpack.c.b16 %v217, %v215
    %v280 = vpack.c.b16 %v220, %v218
    %v281 = vpack.c.b16 %v221, %v219
    %v282 = vpack.c.b16 %v224, %v222
    %v283 = vpack.c.b16 %v225, %v223
    %v284 = vpack.c.b16 %v228, %v226
    %v285 = vpack.c.b16 %v229, %v227
    %v286 = vpack.c.b16 %v232, %v230
    %v287 = vpack.c.b16 %v233, %v231
    %v288 = vpack.c.b16 %v236, %v234
    %v289 = vpack.c.b16 %v237, %v235
    %v290 = vpack.c.b16 %v240, %v238
    %v291 = vpack.c.b16 %v241, %v239
    %v292 = vpack.c.b16 %v244, %v242
    %v293 = vpack.c.b16 %v245, %v243
    %v294 = vpack.c.b16 %v248, %v246
    %v295 = vpack.c.b16 %v249, %v247
    %v296 = vpack.c.b16 %v252, %v250
    %v297 = vpack.c.b16 %v253, %v251
    %v298 = vpack.c.b16 %v256, %v254
    %v299 = vpack.c.b16 %v257, %v255
    %v300 = vpack.c.b16 %v260, %v258
    %v301 = vpack.c.b16 %v261, %v259
    %v302 = vpack.c.b16 %v264, %v262
    %v303 = vpack.c.b16 %v265, %v263
    %v304 = vpack.c.b16 %v268, %v266
    %v305 = vpack.c.b16 %v269, %v267
    %v306 = vpack.c.b16 %v272, %v270
    %v307 = vpack.c.b16 %v273, %v271
    %v308 = vpack.c.b16 %v276, %v274
    %v309 = vpack.c.b16 %v277, %v275
    %342 = vmatpush.bf16.msra.mxu0 %v292
    %343 = vmatpush.bf16.msra.mxu0 %v290
    %344 = vmatpush.bf16.msra.mxu0 %v288
    %345 = vmatpush.bf16.msra.mxu0 %v286
    %346 = vmatpush.bf16.msra.mxu0 %v284
    %347 = vmatpush.bf16.msra.mxu0 %v282
    %348 = vmatpush.bf16.msra.mxu0 %v280
    %349 = vmatpush.bf16.msra.mxu0 %v278
    %350 = vmatmul.bf16.gmra.mxu0 %v142
    %v351 = vpop.f32.mrf.mxu0
    %v352 = vadd.f32 %v178, %v351
    %v353 = vpop.f32.mrf.mxu0
    %v354 = vadd.f32 %v178, %v353
    %355 = vdwg.mxu0
    %356 = vmatpush.bf16.msra.mxu0 %v308
    %357 = vmatpush.bf16.msra.mxu0 %v306
    %358 = vmatpush.bf16.msra.mxu0 %v304
    %359 = vmatpush.bf16.msra.mxu0 %v302
    %360 = vmatpush.bf16.msra.mxu0 %v300
    %361 = vmatpush.bf16.msra.mxu0 %v298
    %362 = vmatpush.bf16.msra.mxu0 %v296
    %363 = vmatpush.bf16.msra.mxu0 %v294
    %364 = vmatmul.bf16.gmra.mxu0 %v143
    %v365 = vpop.f32.mrf.mxu0
    %v366 = vadd.f32 %v352, %v365
    %v367 = vpop.f32.mrf.mxu0
    %v368 = vadd.f32 %v354, %v367
    %369 = vdwg.mxu0
    %370 = vmatpush.bf16.msra.mxu0 %v293
    %371 = vmatpush.bf16.msra.mxu0 %v291
    %372 = vmatpush.bf16.msra.mxu0 %v289
    %373 = vmatpush.bf16.msra.mxu0 %v287
    %374 = vmatpush.bf16.msra.mxu0 %v285
    %375 = vmatpush.bf16.msra.mxu0 %v283
    %376 = vmatpush.bf16.msra.mxu0 %v281
    %377 = vmatpush.bf16.msra.mxu0 %v279
    %378 = vmatmul.bf16.gmra.mxu0 %v142
    %v379 = vpop.f32.mrf.mxu0
    %v380 = vadd.f32 %v179, %v379
    %v381 = vpop.f32.mrf.mxu0
    %v382 = vadd.f32 %v179, %v381
    %383 = vdwg.mxu0
    %384 = vmatpush.bf16.msra.mxu0 %v309
    %385 = vmatpush.bf16.msra.mxu0 %v307
    %386 = vmatpush.bf16.msra.mxu0 %v305
    %387 = vmatpush.bf16.msra.mxu0 %v303
    %388 = vmatpush.bf16.msra.mxu0 %v301
    %389 = vmatpush.bf16.msra.mxu0 %v299
    %390 = vmatpush.bf16.msra.mxu0 %v297
    %391 = vmatpush.bf16.msra.mxu0 %v295
    %392 = vmatmul.bf16.gmra.mxu0 %v143
    %v393 = vpop.f32.mrf.mxu0
    %v394 = vadd.f32 %v380, %v393
    %v395 = vpop.f32.mrf.mxu0
    %v396 = vadd.f32 %v382, %v395
    %397 = vdwg.mxu0
    %v398 = vmax.f32 %v366, 0.0
    %v399 = vmax.f32 %v394, 0.0
    %v400 = vmax.f32 %v368, 0.0
    %v401 = vmax.f32 %v396, 0.0
    %v402 = vpack.c.bf16 %v400, %v398
    %v403 = vpack.c.bf16 %v401, %v399
    %v404 = vld [vmem:[#allocation4] sm:$0xf]
    %v405 = vld [vmem:[#allocation4 + $0x4] sm:$0xf]
    %v406 = vld [vmem:[#allocation4 + $0x8] sm:$0xf]
    %v407 = vld [vmem:[#allocation4 + $0xc] sm:$0xf]
    %v408 = vld [vmem:[#allocation4 + $0x10] sm:$0xf]
    %v409 = vld [vmem:[#allocation4 + $0x14] sm:$0xf]
    %v410 = vld [vmem:[#allocation4 + $0x18] sm:$0xf]
    %v411 = vld [vmem:[#allocation4 + $0x1c] sm:$0xf]
    %v412 = vld [vmem:[#allocation4 + $0x20] sm:$0xf]
    %v413 = vld [vmem:[#allocation4 + $0x24] sm:$0xf]
    %v414 = vld [vmem:[#allocation4 + $0x28] sm:$0xf]
    %v415 = vld [vmem:[#allocation4 + $0x2c] sm:$0xf]
    %v416 = vld [vmem:[#allocation4 + $0x30] sm:$0xf]
    %v417 = vld [vmem:[#allocation4 + $0x34] sm:$0xf]
    %v418 = vld [vmem:[#allocation4 + $0x38] sm:$0xf]
    %v419 = vld [vmem:[#allocation4 + $0x3c] sm:$0xf]
    %v420 = vld [vmem:[#allocation4 + $0x40] sm:$0xf]
    %v421 = vld [vmem:[#allocation4 + $0x44] sm:$0xf]
    %v422 = vld [vmem:[#allocation4 + $0x48] sm:$0xf]
    %v423 = vld [vmem:[#allocation4 + $0x4c] sm:$0xf]
    %v424 = vld [vmem:[#allocation4 + $0x50] sm:$0xf]
    %v425 = vld [vmem:[#allocation4 + $0x54] sm:$0xf]
    %v426 = vld [vmem:[#allocation4 + $0x58] sm:$0xf]
    %v427 = vld [vmem:[#allocation4 + $0x5c] sm:$0xf]
    %v428 = vld [vmem:[#allocation4 + $0x60] sm:$0xf]
    %v429 = vld [vmem:[#allocation4 + $0x64] sm:$0xf]
    %v430 = vld [vmem:[#allocation4 + $0x68] sm:$0xf]
    %v431 = vld [vmem:[#allocation4 + $0x6c] sm:$0xf]
    %v432 = vld [vmem:[#allocation4 + $0x70] sm:$0xf]
    %v433 = vld [vmem:[#allocation4 + $0x74] sm:$0xf]
    %v434 = vld [vmem:[#allocation4 + $0x78] sm:$0xf]
    %v435 = vld [vmem:[#allocation4 + $0x7c] sm:$0xf]
    %v436 = vld [vmem:[#allocation6] sm:$0x1]
    %v438 = vperm.slane %v436, 0
    %v472 = vunpack.c.l.b16 %v404
    %v473 = vunpack.c.l.b16 %v405
    %v474 = vunpack.c.l.b16 %v406
    %v475 = vunpack.c.l.b16 %v407
    %v476 = vunpack.c.l.b16 %v408
    %v477 = vunpack.c.l.b16 %v409
    %v478 = vunpack.c.l.b16 %v410
    %v479 = vunpack.c.l.b16 %v411
    %v480 = vunpack.c.l.b16 %v412
    %v481 = vunpack.c.l.b16 %v413
    %v482 = vunpack.c.l.b16 %v414
    %v483 = vunpack.c.l.b16 %v415
    %v484 = vunpack.c.l.b16 %v416
    %v485 = vunpack.c.l.b16 %v417
    %v486 = vunpack.c.l.b16 %v418
    %v487 = vunpack.c.l.b16 %v419
    %v488 = vunpack.c.l.b16 %v420
    %v489 = vunpack.c.l.b16 %v421
    %v490 = vunpack.c.l.b16 %v422
    %v491 = vunpack.c.l.b16 %v423
    %v492 = vunpack.c.l.b16 %v424
    %v493 = vunpack.c.l.b16 %v425
    %v494 = vunpack.c.l.b16 %v426
    %v495 = vunpack.c.l.b16 %v427
    %v496 = vunpack.c.l.b16 %v428
    %v497 = vunpack.c.l.b16 %v429
    %v498 = vunpack.c.l.b16 %v430
    %v499 = vunpack.c.l.b16 %v431
    %v500 = vunpack.c.l.b16 %v432
    %v501 = vunpack.c.l.b16 %v433
    %v502 = vunpack.c.l.b16 %v434
    %v503 = vunpack.c.l.b16 %v435
    %v504 = vpack.c.b16 %v473, %v472
    %v505 = vpack.c.b16 %v475, %v474
    %v506 = vpack.c.b16 %v477, %v476
    %v507 = vpack.c.b16 %v479, %v478
    %v508 = vpack.c.b16 %v481, %v480
    %v509 = vpack.c.b16 %v483, %v482
    %v510 = vpack.c.b16 %v485, %v484
    %v511 = vpack.c.b16 %v487, %v486
    %v512 = vpack.c.b16 %v489, %v488
    %v513 = vpack.c.b16 %v491, %v490
    %v514 = vpack.c.b16 %v493, %v492
    %v515 = vpack.c.b16 %v495, %v494
    %v516 = vpack.c.b16 %v497, %v496
    %v517 = vpack.c.b16 %v499, %v498
    %v518 = vpack.c.b16 %v501, %v500
    %v519 = vpack.c.b16 %v503, %v502
    %536 = vmatpush.bf16.msra.mxu0 %v511
    %537 = vmatpush.bf16.msra.mxu0 %v510
    %538 = vmatpush.bf16.msra.mxu0 %v509
    %539 = vmatpush.bf16.msra.mxu0 %v508
    %540 = vmatpush.bf16.msra.mxu0 %v507
    %541 = vmatpush.bf16.msra.mxu0 %v506
    %542 = vmatpush.bf16.msra.mxu0 %v505
    %543 = vmatpush.bf16.msra.mxu0 %v504
    %544 = vmatmul.bf16.gmra.mxu0 %v402
    %v545 = vpop.f32.mrf.mxu0
    %v546 = vadd.f32 %v438, %v545
    %v547 = vpop.f32.mrf.mxu0
    %v548 = vadd.f32 %v438, %v547
    %549 = vdwg.mxu0
    %550 = vmatpush.bf16.msra.mxu0 %v519
    %551 = vmatpush.bf16.msra.mxu0 %v518
    %552 = vmatpush.bf16.msra.mxu0 %v517
    %553 = vmatpush.bf16.msra.mxu0 %v516
    %554 = vmatpush.bf16.msra.mxu0 %v515
    %555 = vmatpush.bf16.msra.mxu0 %v514
    %556 = vmatpush.bf16.msra.mxu0 %v513
    %557 = vmatpush.bf16.msra.mxu0 %v512
    %558 = vmatmul.bf16.gmra.mxu0 %v403
    %v559 = vpop.f32.mrf.mxu0
    %v560 = vadd.f32 %v546, %v559
    %v561 = vpop.f32.mrf.mxu0
    %v562 = vadd.f32 %v548, %v561
    %563 = vdwg.mxu0
    %v564 = vpack.c.bf16 %v560, %v560
    %v565 = vpack.c.bf16 %v562, %v562
    %566 = vst [vmem:[%s7] sm:$0xf] %v564
    %567 = vst [vmem:[%s7 + $0x4] sm:$0xf] %v565
    // Predicated region
    $region42: #{policy_net_forward.1} parent=1 // pred_check
      _
    $region43: #{policy_net_forward.1} parent=1 // pred_check_branch
      %569 = sbr.rel (0) target = $region45
    $region44: #{policy_net_forward.1} parent=1 // pred_region
      _
    $region45: #{policy_net_forward.1} parent=1 // pred_fallthru
      _
    // Predicated region
    $region46: #{policy_net_forward.1} parent=1 // pred_check
      _
    $region47: #{policy_net_forward.1} parent=1 // pred_check_branch
      %571 = sbr.rel (0) target = $region49
    $region48: #{policy_net_forward.1} parent=1 // pred_region
      _
    $region49: #{policy_net_forward.1} parent=1 // pred_fallthru
      _
    %572 = vsyncpa [#allocation3], 1
    %573 = vsyncpa [#allocation5], 1

</llo_original>
